<compile_context>
chip_gen: v7x
topology: tpu7x:2x2x1
jax: 0.10.0
libtpu: 0.0.40
codegen_flags: <defaults>
</compile_context>

<pallas_src>
import functools

import jax
import jax.numpy as jnp
from jax.experimental import pallas as pl
from jax.experimental.pallas import tpu as pltpu


def _round_up(x, m):
    return (x + m - 1) // m * m


def _sublane_tile(itemsize):
    # Native sublane tiling per dtype width (f32: 8, bf16/f16: 16, int8/fp8: 32).
    return {4: 8, 2: 16, 1: 32}.get(int(itemsize), 8)


def _ce2d_kernel(x_ref, t_ref, out_ref, *, n_classes, rows, tile_l,
                 lane_extent, tiles_per_split, mask_needed):
    j = pl.program_id(2)

    @pl.when(j == 0)
    def _init():
        out_ref[...] = jnp.zeros_like(out_ref)

    # ---- log-softmax over channels as C elementwise slab passes (VPU) ----
    m = x_ref[0, 0].astype(jnp.float32)
    for c in range(1, n_classes):
        m = jnp.maximum(m, x_ref[0, c].astype(jnp.float32))

    t = t_ref[0]                                         # (rows, tile_l) int32
    s_exp = None
    x_tgt = None
    for c in range(n_classes):
        xc = x_ref[0, c].astype(jnp.float32)
        e = jnp.exp(xc - m)
        s_exp = e if s_exp is None else s_exp + e
        pick = jnp.where(t == c, xc, 0.0)
        x_tgt = pick if x_tgt is None else x_tgt + pick
    logp_t = x_tgt - (jnp.log(s_exp) + m)                # (rows, tile_l)

    lane0 = jax.lax.broadcasted_iota(jnp.int32, (rows, 128), 1) == 0

    def _accumulate(vals):
        # Per-step reduce to (rows, 1), placed in lane 0 of the resident
        # (rows, 128) output block (everything else stays zero).
        rowsum = jnp.sum(vals, axis=1, keepdims=True)
        out_ref[...] += jnp.where(lane0, rowsum, 0.0).reshape(1, 1, rows, 128)

    if mask_needed:
        g = pl.program_id(1) * tiles_per_split + j       # global lane-tile index
        is_edge = (g + 1) * tile_l > lane_extent

        @pl.when(jnp.logical_not(is_edge))
        def _interior():
            _accumulate(logp_t)

        @pl.when(is_edge)
        def _edge():
            col = g * tile_l + jax.lax.broadcasted_iota(
                jnp.int32, (rows, tile_l), 1)
            _accumulate(jnp.where(col < lane_extent, logp_t, 0.0))
    else:
        _accumulate(logp_t)


def cross_entropy_loss_2d(outputs, targets, *, target_block_bytes=8 << 20,
                          vmem_budget_bytes=44 << 20):
    """outputs: (N, C, H, W) float; targets: (N, H, W) int. Returns scalar f32.

    Equivalent to nn.NLLLoss2d(weight=None)(F.log_softmax(outputs, dim=1), targets).
    """
    N, C, H, W = outputs.shape
    HW = H * W
    P = N * HW
    itemsize = jnp.dtype(outputs.dtype).itemsize

    # Spatial axis split over (rows sublanes) x (L lanes); free reshape.
    rows = _sublane_tile(itemsize)
    while rows > 1 and HW % rows != 0:
        rows //= 2
    L = HW // rows

    logits = outputs.reshape(N, C, rows, L)
    tgt = targets.astype(jnp.int32).reshape(N, rows, L)

    # ---- lane tile size from a padded-size VMEM estimate ----
    pad_rows_x = _round_up(rows, _sublane_tile(itemsize))    # logits sublane pad
    pad_rows_t = _round_up(rows, 8)                          # int32 targets pad
    # Bytes per lane column: double-buffered logits + targets blocks, plus a
    # conservative allowance for the f32 value temporaries inside the kernel.
    per_col = 2 * (C * pad_rows_x * itemsize + pad_rows_t * 4) + 8 * rows * 4
    fixed = 4 * 8 * 128 * 4                                  # output blocks etc.
    max_cols = max(128, ((vmem_budget_bytes - fixed) // per_col) // 128 * 128)

    want = max(128, (target_block_bytes // max(1, C * itemsize * rows)) // 128 * 128)
    tile_l = min(want, max_cols)
    if tile_l >= L:
        tile_l = L                     # single full-extent tile (any size allowed)
    total_tiles = pl.cdiv(L, tile_l)

    # Second parallel axis: split spatial tiles so both v7x TensorCores have
    # work when the batch axis alone can't be split evenly (N odd / N == 1).
    n_split = 2 if (N % 2 == 1 and total_tiles >= 2) else 1
    tiles_per_split = pl.cdiv(total_tiles, n_split)

    mask_needed = (n_split * tiles_per_split * tile_l) != L
    exact_cover = (n_split * tiles_per_split) == total_tiles

    if exact_cover:
        def _g(s, j):
            return s * tiles_per_split + j
    else:
        # Some trailing (split, tile) steps fall past the last real tile; clamp
        # their block index (their contribution is fully masked in-kernel).
        def _g(s, j):
            return jnp.minimum(s * tiles_per_split + j, total_tiles - 1)

    kernel = functools.partial(
        _ce2d_kernel, n_classes=C, rows=rows, tile_l=tile_l, lane_extent=L,
        tiles_per_split=tiles_per_split, mask_needed=mask_needed)

    partials = pl.pallas_call(
        kernel,
        out_shape=jax.ShapeDtypeStruct((N, n_split, rows, 128), jnp.float32),
        grid_spec=pltpu.PrefetchScalarGridSpec(
            num_scalar_prefetch=0,
            grid=(N, n_split, tiles_per_split),
            in_specs=[
                pl.BlockSpec((1, C, rows, tile_l),
                             lambda n, s, j: (n, 0, 0, _g(s, j))),
                pl.BlockSpec((1, rows, tile_l),
                             lambda n, s, j: (n, 0, _g(s, j))),
            ],
            out_specs=pl.BlockSpec((1, 1, rows, 128),
                                   lambda n, s, j: (n, s, 0, 0)),
        ),
        compiler_params=pltpu.CompilerParams(
            dimension_semantics=("parallel", "parallel", "arbitrary"),
            # Well under v7x's 64 MiB physical VMEM, with headroom for Mosaic
            # internal scratch; also fine on v5e/v6e (128 MiB physical).
            vmem_limit_bytes=int(48 << 20),
        ),
    )(logits, tgt)

    # Only lane 0 of each (n, split) block is nonzero; everything else stayed
    # at its zero init, so a full sum is exact.
    return -jnp.sum(partials) / jnp.float32(P)


def _reference(outputs, targets):
    logp = jax.nn.log_softmax(outputs.astype(jnp.float32), axis=1)
    picked = jnp.take_along_axis(logp, targets[:, None].astype(jnp.int32), axis=1)[:, 0]
    return -jnp.mean(picked)


if __name__ == "__main__":
    key = jax.random.PRNGKey(0)
    k1, k2, k3, k4, k5, k6 = jax.random.split(key, 6)

    # Case 1: small, single full-extent tile per batch row (rows=8, L=32).
    N, C, H, W = 2, 4, 16, 16
    outputs = jax.random.normal(k1, (N, C, H, W), dtype=jnp.float32)
    targets = jax.random.randint(k2, (N, H, W), 0, C, dtype=jnp.int32)
    loss = cross_entropy_loss_2d(outputs, targets)
    jax.block_until_ready(loss)
    ref = _reference(outputs, targets)
    assert jnp.allclose(loss, ref, atol=1e-5, rtol=1e-5), (loss, ref)

    # Case 2: multiple lane tiles with a ragged last tile
    # (rows=8, L=200, tile_l=128 -> 2 tiles, second masked past column 200).
    N2, C2, H2, W2 = 2, 5, 40, 40
    outputs2 = jax.random.normal(k3, (N2, C2, H2, W2), dtype=jnp.float32)
    targets2 = jax.random.randint(k4, (N2, H2, W2), 0, C2, dtype=jnp.int32)
    loss2 = cross_entropy_loss_2d(outputs2, targets2, target_block_bytes=2048)
    jax.block_until_ready(loss2)
    ref2 = _reference(outputs2, targets2)
    assert jnp.allclose(loss2, ref2, atol=1e-5, rtol=1e-5), (loss2, ref2)

    # Case 3: N=1 exercises the spatial split (n_split=2) for v7x megacore,
    # the rows=4 fallback (HW=2500 not divisible by 8), the clamped index map
    # and a fully out-of-range (all-masked) trailing tile.
    N3, C3, H3, W3 = 1, 3, 50, 50
    outputs3 = jax.random.normal(k5, (N3, C3, H3, W3), dtype=jnp.float32)
    targets3 = jax.random.randint(k6, (N3, H3, W3), 0, C3, dtype=jnp.int32)
    loss3 = cross_entropy_loss_2d(outputs3, targets3, target_block_bytes=4096)
    jax.block_until_ready(loss3)
    ref3 = _reference(outputs3, targets3)
    assert jnp.allclose(loss3, ref3, atol=1e-5, rtol=1e-5), (loss3, ref3)

    print("KERNEL_OK")
</pallas_src>

<mosaic_0001>
module attributes {stable_mosaic.version = 11 : i64} {
  func.func @_ce2d_kernel(%arg0: i32, %arg1: i32, %arg2: i32, %arg3: memref<1x4x8x32xf32, #tpu.memory_space<vmem>>, %arg4: memref<1x8x32xi32, #tpu.memory_space<vmem>>, %arg5: memref<1x1x8x128xf32, #tpu.memory_space<vmem>>) attributes {dimension_semantics = [#tpu.dimension_semantics<parallel>, #tpu.dimension_semantics<parallel>, #tpu.dimension_semantics<arbitrary>], iteration_bounds = array<i64: 2, 1, 1>, scalar_prefetch = 0 : i64, scratch_operands = 0 : i64, tpu.core_type = #tpu.core_type<tc>, window_params = [{transform_indices = @transform_0, window_bounds = array<i64: 1, 4, 8, 32>}, {transform_indices = @transform_1, window_bounds = array<i64: 1, 8, 32>}, {transform_indices = @transform_2, window_bounds = array<i64: 1, 1, 8, 128>}]} {
    %c0_i32 = arith.constant 0 : i32
    %0 = arith.cmpi eq, %arg2, %c0_i32 : i32
    %1 = arith.extui %0 : i1 to i32
    %c0_i32_0 = arith.constant 0 : i32
    %2 = arith.cmpi ne, %1, %c0_i32_0 : i32
    scf.if %2 {
      %cst_47 = arith.constant 0.000000e+00 : f32
      %70 = vector.broadcast %cst_47 : f32 to vector<1x1x8x128xf32>
      %c0_48 = arith.constant 0 : index
      %c0_49 = arith.constant 0 : index
      %c0_50 = arith.constant 0 : index
      %c0_51 = arith.constant 0 : index
      %71 = vector.load %arg5[%c0_48, %c0_49, %c0_50, %c0_51] : memref<1x1x8x128xf32, #tpu.memory_space<vmem>>, vector<1x1x8x128xf32>
      tpu.vector_store %arg5[%c0_48, %c0_49, %c0_50, %c0_51], %70 {strides = array<i32>} : memref<1x1x8x128xf32, #tpu.memory_space<vmem>>, vector<1x1x8x128xf32>,
    } else {
    }
    %c0 = arith.constant 0 : index
    %c0_1 = arith.constant 0 : index
    %c0_2 = arith.constant 0 : index
    %c0_3 = arith.constant 0 : index
    %3 = vector.load %arg3[%c0, %c0_1, %c0_2, %c0_3] : memref<1x4x8x32xf32, #tpu.memory_space<vmem>>, vector<1x1x8x32xf32>
    %4 = vector.shape_cast %3 : vector<1x1x8x32xf32> to vector<8x32xf32>
    %c0_4 = arith.constant 0 : index
    %c1 = arith.constant 1 : index
    %c0_5 = arith.constant 0 : index
    %c0_6 = arith.constant 0 : index
    %5 = vector.load %arg3[%c0_4, %c1, %c0_5, %c0_6] : memref<1x4x8x32xf32, #tpu.memory_space<vmem>>, vector<1x1x8x32xf32>
    %6 = vector.shape_cast %5 : vector<1x1x8x32xf32> to vector<8x32xf32>
    %7 = arith.maximumf %4, %6 : vector<8x32xf32>
    %c0_7 = arith.constant 0 : index
    %c2 = arith.constant 2 : index
    %c0_8 = arith.constant 0 : index
    %c0_9 = arith.constant 0 : index
    %8 = vector.load %arg3[%c0_7, %c2, %c0_8, %c0_9] : memref<1x4x8x32xf32, #tpu.memory_space<vmem>>, vector<1x1x8x32xf32>
    %9 = vector.shape_cast %8 : vector<1x1x8x32xf32> to vector<8x32xf32>
    %10 = arith.maximumf %7, %9 : vector<8x32xf32>
    %c0_10 = arith.constant 0 : index
    %c3 = arith.constant 3 : index
    %c0_11 = arith.constant 0 : index
    %c0_12 = arith.constant 0 : index
    %11 = vector.load %arg3[%c0_10, %c3, %c0_11, %c0_12] : memref<1x4x8x32xf32, #tpu.memory_space<vmem>>, vector<1x1x8x32xf32>
    %12 = vector.shape_cast %11 : vector<1x1x8x32xf32> to vector<8x32xf32>
    %13 = arith.maximumf %10, %12 : vector<8x32xf32>
    %c0_13 = arith.constant 0 : index
    %c0_14 = arith.constant 0 : index
    %c0_15 = arith.constant 0 : index
    %14 = vector.load %arg4[%c0_13, %c0_14, %c0_15] : memref<1x8x32xi32, #tpu.memory_space<vmem>>, vector<1x8x32xi32>
    %15 = vector.shape_cast %14 : vector<1x8x32xi32> to vector<8x32xi32>
    %c0_16 = arith.constant 0 : index
    %c0_17 = arith.constant 0 : index
    %c0_18 = arith.constant 0 : index
    %c0_19 = arith.constant 0 : index
    %16 = vector.load %arg3[%c0_16, %c0_17, %c0_18, %c0_19] : memref<1x4x8x32xf32, #tpu.memory_space<vmem>>, vector<1x1x8x32xf32>
    %17 = vector.shape_cast %16 : vector<1x1x8x32xf32> to vector<8x32xf32>
    %18 = arith.subf %17, %13 : vector<8x32xf32>
    %19 = math.exp %18 : vector<8x32xf32>
    %c0_i32_20 = arith.constant 0 : i32
    %20 = vector.broadcast %c0_i32_20 : i32 to vector<8x32xi32>
    %21 = arith.cmpi eq, %15, %20 : vector<8x32xi32>
    %cst = arith.constant 0.000000e+00 : f32
    %22 = vector.broadcast %cst : f32 to vector<8x32xf32>
    %23 = arith.select %21, %17, %22 : vector<8x32xi1>, vector<8x32xf32>
    %c0_21 = arith.constant 0 : index
    %c1_22 = arith.constant 1 : index
    %c0_23 = arith.constant 0 : index
    %c0_24 = arith.constant 0 : index
    %24 = vector.load %arg3[%c0_21, %c1_22, %c0_23, %c0_24] : memref<1x4x8x32xf32, #tpu.memory_space<vmem>>, vector<1x1x8x32xf32>
    %25 = vector.shape_cast %24 : vector<1x1x8x32xf32> to vector<8x32xf32>
    %26 = arith.subf %25, %13 : vector<8x32xf32>
    %27 = math.exp %26 : vector<8x32xf32>
    %28 = arith.addf %19, %27 : vector<8x32xf32>
    %c1_i32 = arith.constant 1 : i32
    %29 = vector.broadcast %c1_i32 : i32 to vector<8x32xi32>
    %30 = arith.cmpi eq, %15, %29 : vector<8x32xi32>
    %cst_25 = arith.constant 0.000000e+00 : f32
    %31 = vector.broadcast %cst_25 : f32 to vector<8x32xf32>
    %32 = arith.select %30, %25, %31 : vector<8x32xi1>, vector<8x32xf32>
    %33 = arith.addf %23, %32 : vector<8x32xf32>
    %c0_26 = arith.constant 0 : index
    %c2_27 = arith.constant 2 : index
    %c0_28 = arith.constant 0 : index
    %c0_29 = arith.constant 0 : index
    %34 = vector.load %arg3[%c0_26, %c2_27, %c0_28, %c0_29] : memref<1x4x8x32xf32, #tpu.memory_space<vmem>>, vector<1x1x8x32xf32>
    %35 = vector.shape_cast %34 : vector<1x1x8x32xf32> to vector<8x32xf32>
    %36 = arith.subf %35, %13 : vector<8x32xf32>
    %37 = math.exp %36 : vector<8x32xf32>
    %38 = arith.addf %28, %37 : vector<8x32xf32>
    %c2_i32 = arith.constant 2 : i32
    %39 = vector.broadcast %c2_i32 : i32 to vector<8x32xi32>
    %40 = arith.cmpi eq, %15, %39 : vector<8x32xi32>
    %cst_30 = arith.constant 0.000000e+00 : f32
    %41 = vector.broadcast %cst_30 : f32 to vector<8x32xf32>
    %42 = arith.select %40, %35, %41 : vector<8x32xi1>, vector<8x32xf32>
    %43 = arith.addf %33, %42 : vector<8x32xf32>
    %c0_31 = arith.constant 0 : index
    %c3_32 = arith.constant 3 : index
    %c0_33 = arith.constant 0 : index
    %c0_34 = arith.constant 0 : index
    %44 = vector.load %arg3[%c0_31, %c3_32, %c0_33, %c0_34] : memref<1x4x8x32xf32, #tpu.memory_space<vmem>>, vector<1x1x8x32xf32>
    %45 = vector.shape_cast %44 : vector<1x1x8x32xf32> to vector<8x32xf32>
    %46 = arith.subf %45, %13 : vector<8x32xf32>
    %47 = math.exp %46 : vector<8x32xf32>
    %48 = arith.addf %38, %47 : vector<8x32xf32>
    %c3_i32 = arith.constant 3 : i32
    %49 = vector.broadcast %c3_i32 : i32 to vector<8x32xi32>
    %50 = arith.cmpi eq, %15, %49 : vector<8x32xi32>
    %cst_35 = arith.constant 0.000000e+00 : f32
    %51 = vector.broadcast %cst_35 : f32 to vector<8x32xf32>
    %52 = arith.select %50, %45, %51 : vector<8x32xi1>, vector<8x32xf32>
    %53 = arith.addf %43, %52 : vector<8x32xf32>
    %54 = math.log %48 : vector<8x32xf32>
    %55 = arith.addf %54, %13 : vector<8x32xf32>
    %56 = arith.subf %53, %55 : vector<8x32xf32>
    %57 = tpu.iota {dimensions = array<i32: 1>} : vector<8x128xi32>
    %c0_i32_36 = arith.constant 0 : i32
    %58 = vector.broadcast %c0_i32_36 : i32 to vector<8x128xi32>
    %59 = arith.cmpi eq, %57, %58 : vector<8x128xi32>
    %cst_37 = arith.constant dense<0.000000e+00> : vector<8xf32>
    %60 = vector.multi_reduction <add>, %56, %cst_37 [1] : vector<8x32xf32> to vector<8xf32>
    %61 = vector.shape_cast %60 : vector<8xf32> to vector<8x1xf32>
    %c0_38 = arith.constant 0 : index
    %c0_39 = arith.constant 0 : index
    %c0_40 = arith.constant 0 : index
    %c0_41 = arith.constant 0 : index
    %62 = vector.load %arg5[%c0_38, %c0_39, %c0_40, %c0_41] : memref<1x1x8x128xf32, #tpu.memory_space<vmem>>, vector<1x1x8x128xf32>
    %cst_42 = arith.constant 0.000000e+00 : f32
    %63 = vector.shape_cast %61 : vector<8x1xf32> to vector<8x1xf32>
    %64 = vector.broadcast %63 : vector<8x1xf32> to vector<8x128xf32>
    %65 = vector.broadcast %cst_42 : f32 to vector<8x128xf32>
    %66 = arith.select %59, %64, %65 : vector<8x128xi1>, vector<8x128xf32>
    %67 = vector.shape_cast %66 : vector<8x128xf32> to vector<1x1x8x128xf32>
    %68 = arith.addf %62, %67 : vector<1x1x8x128xf32>
    %c0_43 = arith.constant 0 : index
    %c0_44 = arith.constant 0 : index
    %c0_45 = arith.constant 0 : index
    %c0_46 = arith.constant 0 : index
    %69 = vector.load %arg5[%c0_43, %c0_44, %c0_45, %c0_46] : memref<1x1x8x128xf32, #tpu.memory_space<vmem>>, vector<1x1x8x128xf32>
    tpu.vector_store %arg5[%c0_43, %c0_44, %c0_45, %c0_46], %68 {strides = array<i32>} : memref<1x1x8x128xf32, #tpu.memory_space<vmem>>, vector<1x1x8x128xf32>,
    return
  }
  func.func @transform_0(%arg0: i32, %arg1: i32, %arg2: i32) -> (i32, i32, i32, i32) {
    %c1_i32 = arith.constant 1 : i32
    %0 = arith.muli %arg1, %c1_i32 : i32
    %1 = arith.addi %0, %arg2 : i32
    %c0_i32 = arith.constant 0 : i32
    %c0_i32_0 = arith.constant 0 : i32
    %c0_i32_1 = arith.constant 0 : i32
    return %arg0, %c0_i32, %c0_i32_0, %1 : i32, i32, i32, i32
  }
  func.func @transform_1(%arg0: i32, %arg1: i32, %arg2: i32) -> (i32, i32, i32) {
    %c1_i32 = arith.constant 1 : i32
    %0 = arith.muli %arg1, %c1_i32 : i32
    %1 = arith.addi %0, %arg2 : i32
    %c0_i32 = arith.constant 0 : i32
    %c0_i32_0 = arith.constant 0 : i32
    return %arg0, %c0_i32, %1 : i32, i32, i32
  }
  func.func @transform_2(%arg0: i32, %arg1: i32, %arg2: i32) -> (i32, i32, i32, i32) {
    %c0_i32 = arith.constant 0 : i32
    %c0_i32_0 = arith.constant 0 : i32
    %c0_i32_1 = arith.constant 0 : i32
    return %arg0, %arg1, %c0_i32, %c0_i32_0 : i32, i32, i32, i32
  }
}

</mosaic_0001>

<llo_original>
// kernel: tpu_custom_call.1
$region0: #{tpu_custom_call.1}
  #allocation0 [shape = 'u32[]', space=smem, size = 0x4, offset = 0x4, fixed_abs, tag = 'smem constant byte address 0x4 - core index']
  #allocation1 [shape = 'u32[144,128]{1,0:T(1,128)}', space=vmem, size = 0x12000, scoped, tag = 'internal scratch']
  %s0 = inlined_call_operand.hbm [shape: f32[2,4,8,32], index: 0, kind: input, shape index: {}]
  %s1 = inlined_call_operand.hbm [shape: s32[2,8,32], index: 1, kind: input, shape index: {}]
  %s2 = inlined_call_operand.hbm [shape: f32[2,1,8,128], index: 2, kind: output, shape index: {}]
  %s3 = sld [smem:[#allocation0]]
  $region53: #{tpu_custom_call.1} parent=0
    _
  %s5 = ssub.s32 1, %s3
  %s6 = scalar_select 0, %s5, %s3
  $region1: #{tpu_custom_call.1} parent=0
    #allocation2 [shape = 'u8[32768]{0}', space=vmem, size = 0x8000, scoped, tag = 'input window, operand 0']
    #allocation3 [shape = 's32[2]{0}', space=sflag, size = 0x8, scoped, tag = 'scoped memory for tpu_custom_call.1']
    #allocation4 [shape = 's32[2]{0}', space=sflag, size = 0x8, scoped, tag = 'scoped memory for tpu_custom_call.1']
    #allocation5 [shape = 'u8[8192]{0}', space=vmem, size = 0x2000, scoped, tag = 'input window, operand 1']
    #allocation6 [shape = 's32[2]{0}', space=sflag, size = 0x8, scoped, tag = 'scoped memory for tpu_custom_call.1']
    #allocation7 [shape = 'u8[8192]{0}', space=vmem, size = 0x2000, scoped, tag = 'output window, operand 0']
    %7 = vsyncpa [#allocation3], 0
    %s8 = scalar_lea.sflag [#allocation3], 1
    %9 = vsyncpa %s8, 0
    %10 = vsyncpa [#allocation6], 0
    %s11 = scalar_lea.sflag [#allocation6], 1
    %12 = vsyncpa %s11, 0
    %13 = vsyncpa [#allocation4], 0
    %s14 = scalar_lea.sflag [#allocation4], 1
    %15 = vsyncpa %s14, 0
    loop: start=0, step=1, limit=4
    $region2: #{tpu_custom_call.1} parent=1 // loop_pre_header
      _
    $region3: #{tpu_custom_call.1} parent=1 // loop_header
      %s17 = sphi 0, %s21
      %p18 = scmp.ge.s32.totalorder %s17, 4
      %s24 = sphi 0, %s43
      %s25 = sphi 0, %s39
      %s26 = sphi 0, %s35
      %s27 = sphi 0, %s24
      %s28 = sphi 0, %s25
      %s29 = sphi 0, %s26
      %s30 = sphi 0, %s27
      %s31 = sphi 0, %s28
      %s32 = sphi 0, %s29
      %s50 = sphi 0, %s52
      %s53 = sphi 0, %s50
      %s54 = sphi 0, %s53
      %s70 = sphi 0, %s54
      %s80 = sphi 0, %s82
      %s83 = sphi 0, %s80
      %s84 = sphi 0, %s83
      %s100 = sphi 0, %s84
      %s108 = sphi 0, %s110
      %s111 = sphi 0, %s108
      %s112 = sphi 0, %s111
      %s128 = sphi 0, %s112
    $region4: #{tpu_custom_call.1} parent=1 // loop_header_branch
      %20 = sbr.rel (%p18) target = $region8
    $region5: #{tpu_custom_call.1} parent=1 // loop_body
      %s22 = ssub.s32 %s17, 1
      %s23 = ssub.s32 %s17, 2
      %s33 = sadd.s32 1, %s26
      %p34 = scmp.ge.s32.totalorder %s33, 1
      %s35 = scalar_select %p34, 0, %s33
      %s36 = sadd.s32 1, %s25
      %s37 = scalar_select %p34, %s36, %s25
      %p38 = scmp.ge.s32.totalorder %s37, 1
      %s39 = scalar_select %p38, 0, %s37
      %s40 = sadd.s32 1, %s24
      %s41 = scalar_select %p38, %s40, %s24
      %p42 = scmp.ge.s32.totalorder %s41, 2
      %s43 = scalar_select %p42, 0, %s41
      %s44 = sadd.s32 %s25, %s26
      %s45 = sadd.s32 %s39, %s35
      %s46 = ssub.s32 %s24, %s43
      %s47 = ssub.s32 %s44, %s45
      %s48 = sor.u32 %s46, %s47
      %p49 = scmp.eq.s32.totalorder %s48, 0
      %s51 = sadd.s32 %s50, 1
      %s52 = scalar_select %p49, %s50, %s51
      %p55 = pneg %p49
      %p56 = scmp.eq.s32.totalorder %s17, 1
      %p57 = por %p55, %p56
      %p58 = scmp.ne.s32.totalorder %s50, %s53
      %p59 = scmp.eq.s32.totalorder %s17, 0
      %p60 = por %p58, %p59
      %p61 = scmp.ne.s32.totalorder %s50, %s53
      %p62 = scmp.eq.s32.totalorder %s22, 1
      %p63 = por %p61, %p62
      %p64 = scmp.ne.s32.totalorder %s53, %s54
      %p65 = scmp.eq.s32.totalorder %s22, 0
      %p66 = por %p64, %p65
      %p67 = scmp.ne.s32.totalorder %s53, %s54
      %p68 = scmp.eq.s32.totalorder %s23, 1
      %p69 = por %p67, %p68
      %p71 = scmp.ne.s32.totalorder %s54, %s70
      %p72 = scmp.eq.s32.totalorder %s23, 0
      %p73 = por %p71, %p72
      %s74 = sadd.s32 %s25, %s26
      %s75 = sadd.s32 %s39, %s35
      %s76 = ssub.s32 %s24, %s43
      %s77 = ssub.s32 %s74, %s75
      %s78 = sor.u32 %s76, %s77
      %p79 = scmp.eq.s32.totalorder %s78, 0
      %s81 = sadd.s32 %s80, 1
      %s82 = scalar_select %p79, %s80, %s81
      %p85 = pneg %p79
      %p86 = scmp.eq.s32.totalorder %s17, 1
      %p87 = por %p85, %p86
      %p88 = scmp.ne.s32.totalorder %s80, %s83
      %p89 = scmp.eq.s32.totalorder %s17, 0
      %p90 = por %p88, %p89
      %p91 = scmp.ne.s32.totalorder %s80, %s83
      %p92 = scmp.eq.s32.totalorder %s22, 1
      %p93 = por %p91, %p92
      %p94 = scmp.ne.s32.totalorder %s83, %s84
      %p95 = scmp.eq.s32.totalorder %s22, 0
      %p96 = por %p94, %p95
      %p97 = scmp.ne.s32.totalorder %s83, %s84
      %p98 = scmp.eq.s32.totalorder %s23, 1
      %p99 = por %p97, %p98
      %p101 = scmp.ne.s32.totalorder %s84, %s100
      %p102 = scmp.eq.s32.totalorder %s23, 0
      %p103 = por %p101, %p102
      %s104 = ssub.s32 %s24, %s43
      %s105 = ssub.s32 %s25, %s39
      %s106 = sor.u32 %s104, %s105
      %p107 = scmp.eq.s32.totalorder %s106, 0
      %s109 = sadd.s32 %s108, 1
      %s110 = scalar_select %p107, %s108, %s109
      %p113 = pneg %p107
      %p114 = scmp.eq.s32.totalorder %s17, 1
      %p115 = por %p113, %p114
      %p116 = scmp.ne.s32.totalorder %s108, %s111
      %p117 = scmp.eq.s32.totalorder %s17, 0
      %p118 = por %p116, %p117
      %p119 = scmp.ne.s32.totalorder %s108, %s111
      %p120 = scmp.eq.s32.totalorder %s22, 1
      %p121 = por %p119, %p120
      %p122 = scmp.ne.s32.totalorder %s111, %s112
      %p123 = scmp.eq.s32.totalorder %s22, 0
      %p124 = por %p122, %p123
      %p125 = scmp.ne.s32.totalorder %s111, %s112
      %p126 = scmp.eq.s32.totalorder %s23, 1
      %p127 = por %p125, %p126
      %p129 = scmp.ne.s32.totalorder %s112, %s128
      %p130 = scmp.eq.s32.totalorder %s23, 0
      %p131 = por %p129, %p130
      %p132 = scmp.le.s32.totalorder 1, %s17
      %p133 = scmp.lt.s32.totalorder %s17, 3
      %p134 = pnand %p132, %p133
      %p135 = pneg %p134
      // Predicated region
      $region9: #{tpu_custom_call.1} parent=5 // pred_check
        _
      $region10: #{tpu_custom_call.1} parent=5 // pred_check_branch
        %137 = sbr.rel (%p134) target = $region12
      $region11: #{tpu_custom_call.1} parent=5 // pred_region
        %s138 = ssub.s32 %s17, 1
      $region12: #{tpu_custom_call.1} parent=5 // pred_fallthru
        _
      %p139 = scmp.lt.s32.totalorder %s17, 2
      // Predicated region
      $region13: #{tpu_custom_call.1} parent=5 // pred_check
        %p140 = pneg %p139
      $region14: #{tpu_custom_call.1} parent=5 // pred_check_branch
        %142 = sbr.rel (%p140) target = $region16
      $region15: #{tpu_custom_call.1} parent=5 // pred_region
        // Predicated region
        $region17: #{tpu_custom_call.1} parent=15 // pred_check
          %p143 = pneg %p60
        $region18: #{tpu_custom_call.1} parent=15 // pred_check_branch
          %145 = sbr.rel (%p143) target = $region20
        $region19: #{tpu_custom_call.1} parent=15 // pred_region
          %s146 = sand.u32 %s50, 1
          %s147 = scalar_lea.sflag [#allocation3], %s146
          %s148 = sand.u32 %s50, 1
          %s149 = smul.addr %s148, 32
          %s150 = scalar_lea.vmem [#allocation2], %s149
          %s151 = sadd.s32 %s25, %s26
          %s153 = ssub.s32 512, 512
          %154 = vsyncadd %s147, %s153
          %s155 = smul.addr %s24, 4
          %s156 = sadd.s32 %s151, %s155
          %s157 = smul.addr %s156, 128
          %s158 = scalar_lea.hbm %s0, %s157
          %s159 = sshll.u32 %s150, 4
          %s160 = int_to_ptr.vmem [resolvable:$true] %s159
          %165 = dma.hbm_to_vmem [thread:$0]  %s158, 512, %s160, %s147, 128, 128, 8
        $region20: #{tpu_custom_call.1} parent=15 // pred_fallthru
          _
        // Predicated region
        $region21: #{tpu_custom_call.1} parent=15 // pred_check
          %p166 = pneg %p90
        $region22: #{tpu_custom_call.1} parent=15 // pred_check_branch
          %168 = sbr.rel (%p166) target = $region24
        $region23: #{tpu_custom_call.1} parent=15 // pred_region
          %s169 = sand.u32 %s80, 1
          %s170 = scalar_lea.sflag [#allocation6], %s169
          %s171 = sand.u32 %s80, 1
          %s172 = smul.addr %s171, 8
          %s173 = scalar_lea.vmem [#allocation5], %s172
          %s174 = sadd.s32 %s25, %s26
          %s176 = ssub.s32 128, 128
          %177 = vsyncadd %s170, %s176
          %s178 = sadd.s32 %s174, %s24
          %s179 = smul.addr %s178, 128
          %s180 = scalar_lea.hbm %s1, %s179
          %s182 = sshll.u32 %s173, 4
          %s183 = int_to_ptr.vmem [resolvable:$true] %s182
          %185 = dma.hbm_to_vmem [thread:$0]  %s180, 128, %s183, %s170
        $region24: #{tpu_custom_call.1} parent=15 // pred_fallthru
          _
      $region16: #{tpu_custom_call.1} parent=5 // pred_fallthru
        _
      %p186 = scmp.le.s32.totalorder 1, %s17
      %p187 = scmp.lt.s32.totalorder %s17, 3
      %p188 = pnand %p186, %p187
      %p189 = pneg %p188
      // Predicated region
      $region25: #{tpu_custom_call.1} parent=5 // pred_check
        _
      $region26: #{tpu_custom_call.1} parent=5 // pred_check_branch
        %191 = sbr.rel (%p188) target = $region28
      $region27: #{tpu_custom_call.1} parent=5 // pred_region
        %s192 = ssub.s32 %s17, 1
        %s193 = sand.u32 %s53, 1
        %s194 = scalar_lea.sflag [#allocation3], %s193
        %s195 = sand.u32 %s53, 1
        %s196 = smul.addr %s195, 32
        %s197 = scalar_lea.vmem [#allocation2], %s196
        // Predicated region
        $region29: #{tpu_custom_call.1} parent=27 // pred_check
          %p198 = pneg %p66
        $region30: #{tpu_custom_call.1} parent=27 // pred_check_branch
          %200 = sbr.rel (%p198) target = $region32
        $region31: #{tpu_custom_call.1} parent=27 // pred_region
          %201 = dma.done %s194, 512
        $region32: #{tpu_custom_call.1} parent=27 // pred_fallthru
          _
        %s202 = sand.u32 %s83, 1
        %s203 = scalar_lea.sflag [#allocation6], %s202
        %s204 = sand.u32 %s83, 1
        %s205 = smul.addr %s204, 8
        %s206 = scalar_lea.vmem [#allocation5], %s205
        // Predicated region
        $region33: #{tpu_custom_call.1} parent=27 // pred_check
          %p207 = pneg %p96
        $region34: #{tpu_custom_call.1} parent=27 // pred_check_branch
          %209 = sbr.rel (%p207) target = $region36
        $region35: #{tpu_custom_call.1} parent=27 // pred_region
          %210 = dma.done %s203, 128
        $region36: #{tpu_custom_call.1} parent=27 // pred_fallthru
          _
        %s211 = sand.u32 %s53, 1
        %s212 = scalar_lea.sflag [#allocation3], %s211
        %s213 = sand.u32 %s53, 1
        %s214 = smul.addr %s213, 32
        %s215 = scalar_lea.vmem [#allocation2], %s214
        %p216 = pneg %p66
        %p217 = pneg %p63
        %s218 = sand.u32 %s83, 1
        %s219 = scalar_lea.sflag [#allocation6], %s218
        %s220 = sand.u32 %s83, 1
        %s221 = smul.addr %s220, 8
        %s222 = scalar_lea.vmem [#allocation5], %s221
        %p223 = pneg %p96
        %p224 = pneg %p93
        %p225 = pneg %p124
        %p226 = pneg %p121
        %s227 = sand.u32 %s111, 1
        %s228 = scalar_lea.sflag [#allocation4], %s227
        %s229 = sand.u32 %s111, 1
        %s230 = smul.addr %s229, 8
        %s231 = scalar_lea.vmem [#allocation7], %s230
        %s232 = sadd.s32 %s28, %s29
        %s233 = sadd.s32 %s28, %s29
        %p234 = scmp.eq.s32.totalorder %s29, 0
        // Predicated region
        $region37: #{tpu_custom_call.1} parent=27 // pred_check
          %p235 = pneg %p234
        $region38: #{tpu_custom_call.1} parent=27 // pred_check_branch
          %237 = sbr.rel (%p235) target = $region40
        $region39: #{tpu_custom_call.1} parent=27 // pred_region
          %238 = vst [vmem:[%s231] sm:$0xff] 0.0
        $region40: #{tpu_custom_call.1} parent=27 // pred_fallthru
          _
        %v239 = vld [vmem:[%s197] sm:$0xff]
        %s240 = scalar_lea.vmem %s197, 8 [#allocation2]
        %v241 = vld [vmem:[%s240] sm:$0xff]
        %v242 = vmax.f32 %v239, %v241
        %s243 = scalar_lea.vmem %s197, 16 [#allocation2]
        %v244 = vld [vmem:[%s243] sm:$0xff]
        %v245 = vmax.f32 %v242, %v244
        %s246 = scalar_lea.vmem %s197, 24 [#allocation2]
        %v247 = vld [vmem:[%s246] sm:$0xff]
        %v248 = vmax.f32 %v245, %v247
        %v249 = vld [vmem:[%s206] sm:$0xff]
        %v250 = vsub.f32 %v239, %v248
        %v251 = vmul.f32 %v250, 1.442695
        %v252 = vpow.pop %v251
        %vm253 = vcmp.eq.s32.totalorder %v249, 0
        %v254 = vsel %vm253, %v239, 0.0
        %v255 = vsub.f32 %v241, %v248
        %v256 = vmul.f32 %v255, 1.442695
        %v257 = vpow.pop %v256
        %v258 = vadd.f32 %v252, %v257
        %vm259 = vcmp.eq.s32.totalorder %v249, 1
        %v260 = vsel %vm259, %v241, 0.0
        %v261 = vadd.f32 %v254, %v260
        %v262 = vsub.f32 %v244, %v248
        %v263 = vmul.f32 %v262, 1.442695
        %v264 = vpow.pop %v263
        %v265 = vadd.f32 %v258, %v264
        %vm266 = vcmp.eq.s32.totalorder %v249, 2
        %v267 = vsel %vm266, %v244, 0.0
        %v268 = vadd.f32 %v261, %v267
        %v269 = vsub.f32 %v247, %v248
        %v270 = vmul.f32 %v269, 1.442695
        %v271 = vpow.pop %v270
        %v272 = vadd.f32 %v265, %v271
        %vm273 = vcmp.eq.s32.totalorder %v249, 3
        %v274 = vsel %vm273, %v247, 0.0
        %v275 = vadd.f32 %v268, %v274
        %v276 = vlog2.pop %v272
        %v277 = vmul.f32 %v276, 0.6931472
        %v278 = vadd.f32 %v277, %v248
        %v279 = vsub.f32 %v275, %v278
        %v280 = vlaneseq
        %v281 = vand.u32 %v280, 127
        %vm282 = vcmp.eq.s32.totalorder %v281, 0
        %vm283 = vcmask 261120
        %v284 = vsel %vm283, %v279, 0.0
        %285 = vadd.xlane.f32.xlu0 %v284
        %v286 = vpop.xlane.xlu0 %285
        %v287 = vld [vmem:[%s231] sm:$0xff]
        %v288 = vsel %vm282, %v286, 0.0
        %v289 = vadd.f32 %v287, %v288
        %290 = vst [vmem:[%s231] sm:$0xff] %v289
        %s291 = sand.u32 %s111, 1
        %s292 = scalar_lea.sflag [#allocation4], %s291
        %s293 = sand.u32 %s111, 1
        %s294 = smul.addr %s293, 8
        %s295 = scalar_lea.vmem [#allocation7], %s294
        // Predicated region
        $region41: #{tpu_custom_call.1} parent=27 // pred_check
          %p296 = pneg %p121
        $region42: #{tpu_custom_call.1} parent=27 // pred_check_branch
          %298 = sbr.rel (%p296) target = $region44
        $region43: #{tpu_custom_call.1} parent=27 // pred_region
          %s300 = ssub.s32 128, 128
          %301 = vsyncadd %s292, %s300
          %s302 = sadd.s32 %s28, %s27
          %s303 = smul.addr %s302, 128
          %s304 = scalar_lea.hbm %s2, %s303
          %s306 = sshll.u32 %s295, 4
          %s307 = int_to_ptr.vmem [resolvable:$true] %s306
          %309 = dma.vmem_to_hbm [thread:$0]  %s307, 128, %s304, %s292
        $region44: #{tpu_custom_call.1} parent=27 // pred_fallthru
          _
      $region28: #{tpu_custom_call.1} parent=5 // pred_fallthru
        _
      %p310 = scmp.le.s32.totalorder 2, %s17
      // Predicated region
      $region45: #{tpu_custom_call.1} parent=5 // pred_check
        %p311 = pneg %p310
      $region46: #{tpu_custom_call.1} parent=5 // pred_check_branch
        %313 = sbr.rel (%p311) target = $region48
      $region47: #{tpu_custom_call.1} parent=5 // pred_region
        %s314 = ssub.s32 %s17, 2
        // Predicated region
        $region49: #{tpu_custom_call.1} parent=47 // pred_check
          %p315 = pneg %p127
        $region50: #{tpu_custom_call.1} parent=47 // pred_check_branch
          %317 = sbr.rel (%p315) target = $region52
        $region51: #{tpu_custom_call.1} parent=47 // pred_region
          %s318 = sand.u32 %s112, 1
          %s319 = scalar_lea.sflag [#allocation4], %s318
          %s320 = sand.u32 %s112, 1
          %s321 = smul.addr %s320, 8
          %s322 = scalar_lea.vmem [#allocation7], %s321
          %323 = dma.done %s319, 128
        $region52: #{tpu_custom_call.1} parent=47 // pred_fallthru
          _
      $region48: #{tpu_custom_call.1} parent=5 // pred_fallthru
        _
    $region6: #{tpu_custom_call.1} parent=1 // loop_footer
      %s21 = sadd.s32 1, %s17
    $region7: #{tpu_custom_call.1} parent=1 // loop_footer_branch
      %16 = sbr.rel target = $region3
    $region8: #{tpu_custom_call.1} parent=1 // loop_exit
      _
    %324 = vsyncpa [#allocation3], 1
    %s325 = scalar_lea.sflag [#allocation3], 1
    %326 = vsyncpa %s325, 1
    %327 = vsyncpa [#allocation6], 1
    %s328 = scalar_lea.sflag [#allocation6], 1
    %329 = vsyncpa %s328, 1
    %330 = vsyncpa [#allocation4], 1
    %s331 = scalar_lea.sflag [#allocation4], 1
    %332 = vsyncpa %s331, 1

</llo_original>
